<compile_context>
chip_gen: v7x
topology: tpu7x:2x2x1
jax: 0.10.0
libtpu: 0.0.40
codegen_flags: <defaults>
</compile_context>

<pallas_src>
import functools

import jax
import jax.numpy as jnp
from jax.experimental import pallas as pl
from jax.experimental.pallas import tpu as pltpu


def _flattened_shape(shape, start_dim, end_dim):
    """Replicates the reference forward()'s shape computation exactly.

    NOTE: the reference uses `len(input) + 1` (i.e. shape[0] + 1), NOT ndim,
    as the exclusive end when end_dim == -1.  Replicated intentionally
    (documented per review) to keep forward-pass semantics identical.
    Negative start_dim / end_dim follow Python slicing, same as the reference.
    """
    actual_end_dim = shape[0] + 1 if end_dim == -1 else end_dim + 1
    left = shape[:start_dim]
    mid = shape[start_dim:actual_end_dim]
    right = shape[actual_end_dim:]
    flat = 1
    for d in mid:
        flat *= int(d)
    return tuple(left) + (flat,) + tuple(right)


def _hbm_copy_kernel(x_hbm, o_hbm, sem):
    # Single HBM->HBM DMA of the whole array.  Runs at HBM copy roofline with
    # no lane-alignment requirements (handles any shape, any dtype).
    cp = pltpu.make_async_copy(x_hbm, o_hbm, sem)
    cp.start()
    cp.wait()


@functools.partial(jax.jit, static_argnames=("start_dim", "end_dim", "materialize"))
def flatten_forward(x, start_dim=1, end_dim=-1, materialize=False):
    out_shape = _flattened_shape(x.shape, start_dim, end_dim)

    if not materialize:
        # Flatten on a contiguous row-major array is free wrapper-side
        # metadata: zero bytes of HBM traffic.  This is the default path.
        return x.reshape(out_shape)

    # Materialized fresh-buffer copy requested: one whole-array HBM->HBM DMA.
    itemsize = jnp.dtype(x.dtype).itemsize
    out = pl.pallas_call(
        _hbm_copy_kernel,
        out_shape=jax.ShapeDtypeStruct(x.shape, x.dtype),
        in_specs=[pl.BlockSpec(memory_space=pl.ANY)],
        out_specs=pl.BlockSpec(memory_space=pl.ANY),
        scratch_shapes=[pltpu.SemaphoreType.DMA(())],
        cost_estimate=pl.CostEstimate(
            flops=0,
            transcendentals=0,
            bytes_accessed=2 * x.size * itemsize),
    )(x)
    # The logical flatten itself remains a free metadata reshape.
    return out.reshape(out_shape)


if __name__ == "__main__":
    key = jax.random.PRNGKey(0)
    x = jax.random.normal(key, (2, 4, 16, 16), dtype=jnp.float32)

    # Reference semantics (bug-for-bug with the PyTorch module):
    # default Flatten(): actual_end_dim = len(x) + 1 = 3  ->  (2, 4*16, 16)
    ref_default = x.reshape((2, 64, 16))

    # Materialized path: exercises the Pallas HBM->HBM DMA kernel.
    y = jax.block_until_ready(flatten_forward(x, materialize=True))
    assert y.shape == (2, 64, 16), y.shape
    assert jnp.array_equal(y, ref_default)

    # Default zero-copy (metadata) path gives the identical result.
    y_meta = jax.block_until_ready(flatten_forward(x))
    assert y_meta.shape == (2, 64, 16), y_meta.shape
    assert jnp.array_equal(y_meta, ref_default)

    # Explicit dims: Flatten(start_dim=2, end_dim=3)  ->  (2, 4, 256)
    y2 = jax.block_until_ready(
        flatten_forward(x, start_dim=2, end_dim=3, materialize=True))
    assert y2.shape == (2, 4, 256), y2.shape
    assert jnp.array_equal(y2, x.reshape((2, 4, 256)))

    # Explicit dims: Flatten(start_dim=0, end_dim=1)  ->  (8, 16, 16)
    y3 = jax.block_until_ready(
        flatten_forward(x, start_dim=0, end_dim=1, materialize=True))
    assert y3.shape == (8, 16, 16), y3.shape
    assert jnp.array_equal(y3, x.reshape((8, 16, 16)))

    print("KERNEL_OK")
</pallas_src>

<mosaic_0001>
module attributes {stable_mosaic.version = 11 : i64} {
  func.func @_hbm_copy_kernel(%arg0: memref<2x4x16x16xf32, #tpu.memory_space<any>>, %arg1: memref<2x4x16x16xf32, #tpu.memory_space<any>>, %arg2: memref<!tpu.dma_semaphore, #tpu.memory_space<semaphore_mem>>) attributes {dimension_semantics = [], scalar_prefetch = 0 : i64, scratch_operands = 1 : i64, tpu.core_type = #tpu.core_type<tc>} {
    tpu.enqueue_dma source(%arg0 : memref<2x4x16x16xf32, #tpu.memory_space<any>>) target(%arg1 : memref<2x4x16x16xf32, #tpu.memory_space<any>>) target_semaphore(%arg2 : memref<!tpu.dma_semaphore, #tpu.memory_space<semaphore_mem>>)
    tpu.wait_dma2 semaphore(%arg2 : memref<!tpu.dma_semaphore, #tpu.memory_space<semaphore_mem>>) src(%arg0 : memref<2x4x16x16xf32, #tpu.memory_space<any>>) dst(%arg1 : memref<2x4x16x16xf32, #tpu.memory_space<any>>)
    return
  }
}

</mosaic_0001>

<llo_original>
// kernel: flatten_forward.1
$region0: #{flatten_forward.1}
  #allocation0 [shape = 'u32[]', space=smem, size = 0x4, offset = 0x4, fixed_abs, tag = 'smem constant byte address 0x4 - core index']
  #allocation1 [shape = 'u32[144,128]{1,0:T(1,128)}', space=vmem, size = 0x12000, scoped, tag = 'internal scratch']
  #allocation2 [shape = 's32[1]{0}', space=sflag, size = 0x4, scoped, tag = 'scratch operand']
  #allocation3 [shape = 's32[]', space=sflag, size = 0x4, offset = 0, fixed_abs, tag = 'sflag constant byte address 0x0 - dummy sync flag']
  #allocation4 [shape = 's32[]', space=sflag, size = 0x4, offset = 0, fixed_abs, tag = 'sflag constant byte address 0x0 - dummy sync flag']
  #allocation5 [shape = 'u32[]', space=smem, size = 0x4, offset = 0x44, fixed_abs, tag = 'smem constant byte address 0x44 - assertion arg 0']
  #allocation6 [shape = 'u32[]', space=smem, size = 0x4, offset = 0x48, fixed_abs, tag = 'smem constant byte address 0x48 - assertion arg 1']
  %s0 = inlined_call_operand.hbm [shape: f32[2,4,16,16], index: 0, kind: input, shape index: {}]
  %s1 = inlined_call_operand.vmem [shape: f32[2,4,16,16], index: 1, kind: output, shape index: {}]
  %s2 = sld [smem:[#allocation0]]
  $region6: #{flatten_forward.1} parent=0
    _
  %s4 = ssub.s32 1, %s2
  %s5 = scalar_select 0, %s4, %s2
  // Predicated region
  $region2: #{flatten_forward.1} parent=0 // pred_check
    _
  $region3: #{flatten_forward.1} parent=0 // pred_check_branch
    %7 = sbr.rel target = $region5
  $region4: #{flatten_forward.1} parent=0 // pred_region
    %8 = sst [smem:[#allocation5]] [#allocation4]
    %9 = sst [smem:[#allocation6]] [#allocation3]
  $region5: #{flatten_forward.1} parent=0 // pred_fallthru
    _
  %11 = shalt.err (0)
  %s13 = sshll.u32 %s1, 4
  %s14 = int_to_ptr.vmem [resolvable:$true] %s13
  %16 = dma.hbm_to_vmem [thread:$0]  %s0, 2048, %s14, [#allocation2]
  %s17 = smul.u32 2, 4
  %s18 = smul.u32 %s17, 16
  %s19 = smul.u32 %s18, 1
  %s20 = sshll.u32 %s19, 4
  %21 = dma.done [#allocation2], %s20
  %22 = vsyncmov [#allocation2]
  %s23 = vpop.sfrf %22
  %p24 = scmp.eq.s32.totalorder %s23, 0
  %p25 = pneg %p24
  %27 = shalt.err (%p25)

</llo_original>
